<compile_context>
chip_gen: v6e
topology: v6e:2x2x1
jax: 0.10.0
libtpu: 0.0.40
codegen_flags: <defaults>
</compile_context>

<pallas_src>
import functools

import jax
import jax.numpy as jnp
from jax.experimental import pallas as pl
from jax.experimental.pallas import tpu as pltpu


# ---------------------------------------------------------------------------
# Parameter setup (equivalent of the torch module's __init__ buffers)
# ---------------------------------------------------------------------------
def _make_grid(theta_rad, H, W):
    """Replicates torch.nn.functional.affine_grid(align_corners=False)."""
    x = (2.0 * jnp.arange(W, dtype=jnp.float32) + 1.0) / W - 1.0   # (W,)
    y = (2.0 * jnp.arange(H, dtype=jnp.float32) + 1.0) / H - 1.0   # (H,)
    tc = jnp.cos(theta_rad)[:, None, None]                          # (T,1,1)
    ts = jnp.sin(theta_rad)[:, None, None]
    xg = x[None, None, :]                                           # (1,1,W)
    yg = y[None, :, None]                                           # (1,H,1)
    gx = tc * xg - ts * yg                                          # (T,H,W)
    gy = ts * xg + tc * yg                                          # (T,H,W)
    return gx, gy


def _bilinear_corners(gx, gy, H, W):
    """grid_sample bilinear corner indices/weights (zeros pad, align_corners=False)."""
    ix = ((gx + 1.0) * W - 1.0) / 2.0
    iy = ((gy + 1.0) * H - 1.0) / 2.0
    ix0 = jnp.floor(ix)
    iy0 = jnp.floor(iy)
    wx1 = ix - ix0
    wx0 = 1.0 - wx1
    wy1 = iy - iy0
    wy0 = 1.0 - wy1
    ix0i = ix0.astype(jnp.int32)
    iy0i = iy0.astype(jnp.int32)
    corners = []
    for dy, wy in ((0, wy0), (1, wy1)):
        for dx, wx in ((0, wx0), (1, wx1)):
            xi = ix0i + dx
            yi = iy0i + dy
            valid = (xi >= 0) & (xi < W) & (yi >= 0) & (yi < H)
            w = wx * wy * valid.astype(jnp.float32)
            corners.append((yi, xi, w))
    return corners


def build_system_matrix_T(theta_rad, H, W):
    """A^T[y*W + x, t*W + j] = sum_i (bilinear weight of src pixel (y,x) for
    rotated output pixel (i,j) at angle t).  Built directly in transposed
    layout via scatter-adds (init-time only)."""
    T = theta_rad.shape[0]
    gx, gy = _make_grid(theta_rad, H, W)
    corners = _bilinear_corners(gx, gy, H, W)
    tt, _, jj = jnp.meshgrid(jnp.arange(T), jnp.arange(H), jnp.arange(W),
                             indexing='ij')
    col = (tt * W + jj).reshape(-1)                     # (T*H*W,)
    A_T = jnp.zeros((H * W, T * W), dtype=jnp.float32)
    for yi, xi, w in corners:
        row = (jnp.clip(yi, 0, H - 1) * W + jnp.clip(xi, 0, W - 1)).reshape(-1)
        A_T = A_T.at[row, col].add(w.reshape(-1))       # invalid corners have w=0
    return A_T


# ---------------------------------------------------------------------------
# Pallas kernel: tiled matmul  (C, HW) @ (HW, TW) -> (C, TW)
#   grid = (TW/tn "parallel", HW/tk "arbitrary" reduction)
#   image (C, HWp) stays resident in VMEM; A^T tiles stream in bf16;
#   accumulate directly into the f32 output block (resident across k).
# ---------------------------------------------------------------------------
def _radon_matmul_kernel(img_ref, at_ref, o_ref, *, tk):
    k = pl.program_id(1)

    @pl.when(k == 0)
    def _():
        o_ref[...] = jnp.zeros_like(o_ref)

    start = pl.multiple_of(k * tk, tk)
    img_blk = img_ref[:, pl.ds(start, tk)].astype(at_ref.dtype)
    o_ref[...] += jnp.dot(img_blk, at_ref[...],
                          preferred_element_type=jnp.float32)


def radon_pallas(image, A_T, T, *, tn=2048, tk=2048):
    """image: (1, C, H, W), A_T: (H*W, T*W) (bf16 or f32) -> sinogram (1, C, T, W).

    Default tn=tk=2048 targets 128 MiB-VMEM chips (v5e/v6e); tiles are clamped
    to the problem size, and the explicit vmem limit is derived from actual
    usage so the same defaults stay within v7x's 64 MiB per-TC VMEM.
    """
    B, C, H, W = image.shape
    assert B == 1, "torch forward expands batch to T, which requires B == 1"
    HW, TW = H * W, T * W
    assert A_T.shape == (HW, TW), A_T.shape

    tn = min(tn, TW)
    tk = min(tk, HW)
    num_j = -(-TW // tn)
    num_k = -(-HW // tk)
    TWp = num_j * tn
    HWp = num_k * tk

    img_flat = image.reshape(C, HW).astype(jnp.float32)
    if HWp != HW:
        img_flat = jnp.pad(img_flat, ((0, 0), (0, HWp - HW)))
    if HWp != HW or TWp != TW:
        # zero padding is exact for a matmul; only hit for odd H/W/T.
        A_T = jnp.pad(A_T, ((0, HWp - HW), (0, TWp - TW)))

    a_item = jnp.dtype(A_T.dtype).itemsize
    vmem_need = (2 * tk * tn * a_item          # double-buffered A^T tiles
                 + 2 * C * HWp * 4             # resident image (conservative x2)
                 + 2 * C * tn * 4)             # output block
    vmem_limit = int(min(vmem_need + (16 << 20), 112 << 20))

    out_flat = pl.pallas_call(
        functools.partial(_radon_matmul_kernel, tk=tk),
        out_shape=jax.ShapeDtypeStruct((C, TWp), jnp.float32),
        grid_spec=pltpu.PrefetchScalarGridSpec(
            num_scalar_prefetch=0,
            grid=(num_j, num_k),
            in_specs=[
                pl.BlockSpec((C, HWp), lambda j, k: (0, 0)),   # image: VMEM-resident
                pl.BlockSpec((tk, tn), lambda j, k: (k, j)),   # stream A^T tiles
            ],
            out_specs=pl.BlockSpec((C, tn), lambda j, k: (0, j)),
        ),
        compiler_params=pltpu.CompilerParams(
            dimension_semantics=("parallel", "arbitrary"),
            vmem_limit_bytes=vmem_limit),
    )(img_flat, A_T)

    # (C, T*W) -> (1, C, T, W), matching torch's permute(2, 1, 0, 3)
    out = out_flat[:, :TW].reshape(C, T, W).astype(image.dtype)
    return out[None]


# ---------------------------------------------------------------------------
# Pure-JAX reference (direct gather) for a correctness check
# ---------------------------------------------------------------------------
def reference_radon(image, theta_rad):
    B, C, H, W = image.shape
    gx, gy = _make_grid(theta_rad, H, W)
    corners = _bilinear_corners(gx, gy, H, W)
    img = image[0]  # (C, H, W)
    sampled = jnp.zeros((C, theta_rad.shape[0], H, W), dtype=jnp.float32)
    for yi, xi, w in corners:
        vals = img[:, jnp.clip(yi, 0, H - 1), jnp.clip(xi, 0, W - 1)]  # (C,T,H,W)
        sampled = sampled + vals * w[None]
    return sampled.sum(axis=2)[None]  # (1, C, T, W)


if __name__ == "__main__":
    key = jax.random.PRNGKey(0)
    B, C, H, W = 1, 4, 16, 16
    # theta is an optional module arg; pick 8 angles over [0, 180) deg.
    theta_deg = jnp.arange(8, dtype=jnp.float32) * 22.5
    theta_rad = jnp.deg2rad(theta_deg)
    T = int(theta_rad.shape[0])

    image = jax.random.normal(key, (B, C, H, W), dtype=jnp.float32)

    # "__init__": deterministic precompute of A^T (already transposed), stored
    # in bf16 for the bandwidth-bound hot path.
    # TODO(synk): grid_sample's data-dependent gather has no native Pallas/TPU
    # gather; it is folded exactly into this precomputed linear operator.
    A_T_f32 = build_system_matrix_T(theta_rad, H, W)
    A_T = jax.block_until_ready(A_T_f32.astype(jnp.bfloat16))

    out = radon_pallas(image, A_T, T)
    out = jax.block_until_ready(out)
    assert out.shape == (1, C, T, W), out.shape

    # 1) tight check of the kernel against a pure-JAX matmul on the same
    #    bf16-quantized operands.
    img_q = image.reshape(C, H * W).astype(jnp.bfloat16).astype(jnp.float32)
    ref_mm = jnp.dot(img_q, A_T.astype(jnp.float32),
                     precision=jax.lax.Precision.HIGHEST).reshape(C, T, W)[None]
    err_mm = float(jnp.max(jnp.abs(out - ref_mm)))
    assert jnp.allclose(out, ref_mm, atol=2e-3, rtol=2e-3), err_mm

    # 2) semantic check against the f32 gather-based radon reference
    #    (looser tolerance: only bf16 quantization of A / image differs).
    ref = reference_radon(image, theta_rad)
    err_ref = float(jnp.max(jnp.abs(out - ref)))
    assert jnp.allclose(out, ref, atol=5e-2, rtol=5e-2), err_ref

    print("KERNEL_OK")
</pallas_src>

<mosaic_0001>
module attributes {stable_mosaic.version = 11 : i64} {
  func.func @_radon_matmul_kernel(%arg0: i32, %arg1: i32, %arg2: memref<4x256xf32, #tpu.memory_space<vmem>>, %arg3: memref<256x128xbf16, #tpu.memory_space<vmem>>, %arg4: memref<4x128xf32, #tpu.memory_space<vmem>>) attributes {dimension_semantics = [#tpu.dimension_semantics<parallel>, #tpu.dimension_semantics<arbitrary>], iteration_bounds = array<i64: 1, 1>, scalar_prefetch = 0 : i64, scratch_operands = 0 : i64, tpu.core_type = #tpu.core_type<tc>, window_params = [{pipeline_mode = #tpu.pipeline_mode<synchronous>, transform_indices = @transform_0, window_bounds = array<i64: 4, 256>}, {transform_indices = @transform_1, window_bounds = array<i64: 256, 128>}, {transform_indices = @transform_2, window_bounds = array<i64: 4, 128>}]} {
    %c0_i32 = arith.constant 0 : i32
    %0 = arith.cmpi eq, %arg1, %c0_i32 : i32
    %1 = arith.extui %0 : i1 to i32
    %c0_i32_0 = arith.constant 0 : i32
    %2 = arith.cmpi ne, %1, %c0_i32_0 : i32
    scf.if %2 {
      %cst_7 = arith.constant 0.000000e+00 : f32
      %13 = vector.broadcast %cst_7 : f32 to vector<4x128xf32>
      %c0_8 = arith.constant 0 : index
      %c0_9 = arith.constant 0 : index
      %14 = vector.load %arg4[%c0_8, %c0_9] : memref<4x128xf32, #tpu.memory_space<vmem>>, vector<4x128xf32>
      tpu.vector_store %arg4[%c0_8, %c0_9], %13 {strides = array<i32>} : memref<4x128xf32, #tpu.memory_space<vmem>>, vector<4x128xf32>,
    } else {
    }
    %c256_i32 = arith.constant 256 : i32
    %3 = arith.muli %arg1, %c256_i32 : i32
    %4 = tpu.assume_multiple %3, 256 : i32
    %c0 = arith.constant 0 : index
    %5 = arith.index_cast %4 : i32 to index
    %6 = vector.load %arg2[%c0, %5] : memref<4x256xf32, #tpu.memory_space<vmem>>, vector<4x256xf32>
    %7 = arith.truncf %6 : vector<4x256xf32> to vector<4x256xbf16>
    %c0_1 = arith.constant 0 : index
    %c0_2 = arith.constant 0 : index
    %8 = vector.load %arg4[%c0_1, %c0_2] : memref<4x128xf32, #tpu.memory_space<vmem>>, vector<4x128xf32>
    %c0_3 = arith.constant 0 : index
    %c0_4 = arith.constant 0 : index
    %9 = vector.load %arg3[%c0_3, %c0_4] : memref<256x128xbf16, #tpu.memory_space<vmem>>, vector<256x128xbf16>
    %cst = arith.constant dense<0.000000e+00> : vector<4x128xf32>
    %10 = tpu.matmul %7, %9, %cst {dimension_numbers = #tpu.dot_dimension_numbers<[1], [0], [0], [1], [0, 0, 1, 1], [], []>} : vector<4x256xbf16>, vector<256x128xbf16>, vector<4x128xf32> -> vector<4x128xf32>
    %11 = arith.addf %8, %10 : vector<4x128xf32>
    %c0_5 = arith.constant 0 : index
    %c0_6 = arith.constant 0 : index
    %12 = vector.load %arg4[%c0_5, %c0_6] : memref<4x128xf32, #tpu.memory_space<vmem>>, vector<4x128xf32>
    tpu.vector_store %arg4[%c0_5, %c0_6], %11 {strides = array<i32>} : memref<4x128xf32, #tpu.memory_space<vmem>>, vector<4x128xf32>,
    return
  }
  func.func @transform_0(%arg0: i32, %arg1: i32) -> (i32, i32) {
    %c0_i32 = arith.constant 0 : i32
    %c0_i32_0 = arith.constant 0 : i32
    %c0_i32_1 = arith.constant 0 : i32
    return %c0_i32, %c0_i32_0 : i32, i32
  }
  func.func @transform_1(%arg0: i32, %arg1: i32) -> (i32, i32) {
    %c0_i32 = arith.constant 0 : i32
    return %arg1, %arg0 : i32, i32
  }
  func.func @transform_2(%arg0: i32, %arg1: i32) -> (i32, i32) {
    %c0_i32 = arith.constant 0 : i32
    %c0_i32_0 = arith.constant 0 : i32
    return %c0_i32, %arg0 : i32, i32
  }
}

</mosaic_0001>

<llo_original>
// kernel: tpu_custom_call.1
$region0: #{tpu_custom_call.1}
  #allocation0 [shape = 'u32[]', space=smem, size = 0x4, offset = 0x4, fixed_abs, tag = 'smem constant byte address 0x4 - core index']
  #allocation1 [shape = 'u32[144,128]{1,0:T(1,128)}', space=vmem, size = 0x12000, scoped, tag = 'internal scratch']
  %s0 = inlined_call_operand.hbm [shape: f32[4,256], index: 0, kind: input, shape index: {}]
  %s1 = inlined_call_operand.hbm [shape: bf16[256,128], index: 1, kind: input, shape index: {}]
  %s2 = inlined_call_operand.hbm [shape: f32[4,128], index: 2, kind: output, shape index: {}]
  %s3 = sld [smem:[#allocation0]]
  $region30: #{tpu_custom_call.1} parent=0
    _
  %s5 = ssub.s32 1, %s3
  %s6 = scalar_select 0, %s5, %s3
  $region1: #{tpu_custom_call.1} parent=0
    #allocation2 [shape = 'u8[4096]{0}', space=vmem, size = 0x1000, scoped, tag = 'input window, operand 0, single buffered']
    #allocation3 [shape = 's32[1]{0}', space=sflag, size = 0x4, scoped, tag = 'scoped memory for tpu_custom_call.1']
    #allocation4 [shape = 's32[1]{0}', space=sflag, size = 0x4, scoped, tag = 'scoped memory for tpu_custom_call.1']
    #allocation5 [shape = 'u8[65536]{0}', space=vmem, size = 0x10000, scoped, tag = 'input window, operand 1, single buffered']
    #allocation6 [shape = 's32[1]{0}', space=sflag, size = 0x4, scoped, tag = 'scoped memory for tpu_custom_call.1']
    #allocation7 [shape = 'u8[2048]{0}', space=vmem, size = 0x800, scoped, tag = 'output window, operand 0, single buffered']
    %7 = vsyncpa [#allocation3], 0
    %8 = vsyncpa [#allocation6], 0
    %9 = vsyncpa [#allocation4], 0
    // Predicated region
    $region2: #{tpu_custom_call.1} parent=1 // pred_check
      _
    $region3: #{tpu_custom_call.1} parent=1 // pred_check_branch
      %11 = sbr.rel (0) target = $region5
    $region4: #{tpu_custom_call.1} parent=1 // pred_region
      %s13 = ssub.s32 128, 128
      %14 = vsyncadd [#allocation3], %s13
      %s16 = sshll.u32 [#allocation2], 4
      %s17 = int_to_ptr.vmem [resolvable:$true] %s16
      %19 = dma.hbm_to_vmem [thread:$0]  %s0, 128, %s17, [#allocation3]
    $region5: #{tpu_custom_call.1} parent=1 // pred_fallthru
      _
    // Predicated region
    $region6: #{tpu_custom_call.1} parent=1 // pred_check
      _
    $region7: #{tpu_custom_call.1} parent=1 // pred_check_branch
      %21 = sbr.rel (0) target = $region9
    $region8: #{tpu_custom_call.1} parent=1 // pred_region
      %s23 = ssub.s32 2048, 2048
      %24 = vsyncadd [#allocation6], %s23
      %s25 = sshll.u32 [#allocation5], 4
      %s26 = int_to_ptr.vmem [resolvable:$true] %s25
      %31 = dma.hbm_to_vmem [thread:$0]  %s1, 2048, %s26, [#allocation6], 64, 64, 4
    $region9: #{tpu_custom_call.1} parent=1 // pred_fallthru
      _
    // Predicated region
    $region10: #{tpu_custom_call.1} parent=1 // pred_check
      _
    $region11: #{tpu_custom_call.1} parent=1 // pred_check_branch
      %33 = sbr.rel (0) target = $region13
    $region12: #{tpu_custom_call.1} parent=1 // pred_region
      %34 = dma.done [#allocation3], 128
    $region13: #{tpu_custom_call.1} parent=1 // pred_fallthru
      _
    // Predicated region
    $region14: #{tpu_custom_call.1} parent=1 // pred_check
      _
    $region15: #{tpu_custom_call.1} parent=1 // pred_check_branch
      %36 = sbr.rel (0) target = $region17
    $region16: #{tpu_custom_call.1} parent=1 // pred_region
      %37 = dma.done [#allocation6], 2048
    $region17: #{tpu_custom_call.1} parent=1 // pred_fallthru
      _
    %p39 = scmp.eq.s32.totalorder 0, 0
    // Predicated region
    $region18: #{tpu_custom_call.1} parent=1 // pred_check
      %p40 = pneg %p39
    $region19: #{tpu_custom_call.1} parent=1 // pred_check_branch
      %42 = sbr.rel (%p40) target = $region21
    $region20: #{tpu_custom_call.1} parent=1 // pred_region
      %43 = vst [vmem:[#allocation7] sm:$0xf] 0.0
    $region21: #{tpu_custom_call.1} parent=1 // pred_fallthru
      _
    %s44 = smul.u32 0, 256
    %s45 = sshra.s32 %s44, 7
    %s46 = sand.u32 %s44, 127
    %s47 = smul.addr %s45, 4
    %s48 = scalar_lea.vmem [#allocation2], %s47
    %v49 = vld [vmem:[%s48] sm:$0xff]
    %v51 = vcombine.high %v49, %v49
    %v53 = vpack.c.bf16 %v49, %v49
    %v54 = vpack.c.bf16 %v51, %v51
    %v55 = vld [vmem:[#allocation7] sm:$0xf]
    %v56 = vld [vmem:[#allocation5] sm:$0xf]
    %v57 = vld [vmem:[#allocation5 + $0x4] sm:$0xf]
    %v58 = vld [vmem:[#allocation5 + $0x8] sm:$0xf]
    %v59 = vld [vmem:[#allocation5 + $0xc] sm:$0xf]
    %v60 = vld [vmem:[#allocation5 + $0x10] sm:$0xf]
    %v61 = vld [vmem:[#allocation5 + $0x14] sm:$0xf]
    %v62 = vld [vmem:[#allocation5 + $0x18] sm:$0xf]
    %v63 = vld [vmem:[#allocation5 + $0x1c] sm:$0xf]
    %v64 = vld [vmem:[#allocation5 + $0x20] sm:$0xf]
    %v65 = vld [vmem:[#allocation5 + $0x24] sm:$0xf]
    %v66 = vld [vmem:[#allocation5 + $0x28] sm:$0xf]
    %v67 = vld [vmem:[#allocation5 + $0x2c] sm:$0xf]
    %v68 = vld [vmem:[#allocation5 + $0x30] sm:$0xf]
    %v69 = vld [vmem:[#allocation5 + $0x34] sm:$0xf]
    %v70 = vld [vmem:[#allocation5 + $0x38] sm:$0xf]
    %v71 = vld [vmem:[#allocation5 + $0x3c] sm:$0xf]
    %v72 = vld [vmem:[#allocation5 + $0x40] sm:$0xf]
    %v73 = vld [vmem:[#allocation5 + $0x44] sm:$0xf]
    %v74 = vld [vmem:[#allocation5 + $0x48] sm:$0xf]
    %v75 = vld [vmem:[#allocation5 + $0x4c] sm:$0xf]
    %v76 = vld [vmem:[#allocation5 + $0x50] sm:$0xf]
    %v77 = vld [vmem:[#allocation5 + $0x54] sm:$0xf]
    %v78 = vld [vmem:[#allocation5 + $0x58] sm:$0xf]
    %v79 = vld [vmem:[#allocation5 + $0x5c] sm:$0xf]
    %v80 = vld [vmem:[#allocation5 + $0x60] sm:$0xf]
    %v81 = vld [vmem:[#allocation5 + $0x64] sm:$0xf]
    %v82 = vld [vmem:[#allocation5 + $0x68] sm:$0xf]
    %v83 = vld [vmem:[#allocation5 + $0x6c] sm:$0xf]
    %v84 = vld [vmem:[#allocation5 + $0x70] sm:$0xf]
    %v85 = vld [vmem:[#allocation5 + $0x74] sm:$0xf]
    %v86 = vld [vmem:[#allocation5 + $0x78] sm:$0xf]
    %v87 = vld [vmem:[#allocation5 + $0x7c] sm:$0xf]
    %v120 = vunpack.c.l.b16 %v56
    %v121 = vunpack.c.l.b16 %v57
    %v122 = vunpack.c.l.b16 %v58
    %v123 = vunpack.c.l.b16 %v59
    %v124 = vunpack.c.l.b16 %v60
    %v125 = vunpack.c.l.b16 %v61
    %v126 = vunpack.c.l.b16 %v62
    %v127 = vunpack.c.l.b16 %v63
    %v128 = vunpack.c.l.b16 %v64
    %v129 = vunpack.c.l.b16 %v65
    %v130 = vunpack.c.l.b16 %v66
    %v131 = vunpack.c.l.b16 %v67
    %v132 = vunpack.c.l.b16 %v68
    %v133 = vunpack.c.l.b16 %v69
    %v134 = vunpack.c.l.b16 %v70
    %v135 = vunpack.c.l.b16 %v71
    %v136 = vunpack.c.l.b16 %v72
    %v137 = vunpack.c.l.b16 %v73
    %v138 = vunpack.c.l.b16 %v74
    %v139 = vunpack.c.l.b16 %v75
    %v140 = vunpack.c.l.b16 %v76
    %v141 = vunpack.c.l.b16 %v77
    %v142 = vunpack.c.l.b16 %v78
    %v143 = vunpack.c.l.b16 %v79
    %v144 = vunpack.c.l.b16 %v80
    %v145 = vunpack.c.l.b16 %v81
    %v146 = vunpack.c.l.b16 %v82
    %v147 = vunpack.c.l.b16 %v83
    %v148 = vunpack.c.l.b16 %v84
    %v149 = vunpack.c.l.b16 %v85
    %v150 = vunpack.c.l.b16 %v86
    %v151 = vunpack.c.l.b16 %v87
    %v152 = vpack.c.b16 %v121, %v120
    %v153 = vpack.c.b16 %v123, %v122
    %v154 = vpack.c.b16 %v125, %v124
    %v155 = vpack.c.b16 %v127, %v126
    %v156 = vpack.c.b16 %v129, %v128
    %v157 = vpack.c.b16 %v131, %v130
    %v158 = vpack.c.b16 %v133, %v132
    %v159 = vpack.c.b16 %v135, %v134
    %v160 = vpack.c.b16 %v137, %v136
    %v161 = vpack.c.b16 %v139, %v138
    %v162 = vpack.c.b16 %v141, %v140
    %v163 = vpack.c.b16 %v143, %v142
    %v164 = vpack.c.b16 %v145, %v144
    %v165 = vpack.c.b16 %v147, %v146
    %v166 = vpack.c.b16 %v149, %v148
    %v167 = vpack.c.b16 %v151, %v150
    %184 = vmatprep.subr.bf16.mxu0 0
    %185 = vmatpush1.bf16.msra.mxu0 %v159
    %186 = vmatprep.subr.bf16.mxu0 0
    %187 = vmatpush1.bf16.msra.mxu0 %v158
    %188 = vmatprep.subr.bf16.mxu0 0
    %189 = vmatpush1.bf16.msra.mxu0 %v157
    %190 = vmatprep.subr.bf16.mxu0 0
    %191 = vmatpush1.bf16.msra.mxu0 %v156
    %192 = vmatprep.subr.bf16.mxu0 0
    %193 = vmatpush1.bf16.msra.mxu0 %v155
    %194 = vmatprep.subr.bf16.mxu0 0
    %195 = vmatpush1.bf16.msra.mxu0 %v154
    %196 = vmatprep.subr.bf16.mxu0 0
    %197 = vmatpush1.bf16.msra.mxu0 %v153
    %198 = vmatprep.subr.bf16.mxu0 0
    %199 = vmatpush1.bf16.msra.mxu0 %v152
    %200 = vmatprep.subr.bf16.mxu0 0
    %201 = vmatpush2.bf16.msra.mxu0 %v167
    %202 = vmatprep.subr.bf16.mxu0 0
    %203 = vmatpush2.bf16.msra.mxu0 %v166
    %204 = vmatprep.subr.bf16.mxu0 0
    %205 = vmatpush2.bf16.msra.mxu0 %v165
    %206 = vmatprep.subr.bf16.mxu0 0
    %207 = vmatpush2.bf16.msra.mxu0 %v164
    %208 = vmatprep.subr.bf16.mxu0 0
    %209 = vmatpush2.bf16.msra.mxu0 %v163
    %210 = vmatprep.subr.bf16.mxu0 0
    %211 = vmatpush2.bf16.msra.mxu0 %v162
    %212 = vmatprep.subr.bf16.mxu0 0
    %213 = vmatpush2.bf16.msra.mxu0 %v161
    %214 = vmatprep.subr.bf16.mxu0 0
    %215 = vmatpush2.bf16.msra.mxu0 %v160
    %216 = vmatprep.mubr.bf16.mxu0 %v54
    %217 = vmatmul.mubr.bf16.gmra.mxu0 %v53
    %v218 = vpop.f32.mrf.mxu0
    %v219 = vadd.f32 0.0, %v218
    %v220 = vpop.f32.mrf.mxu0
    %v221 = vpop.f32.mrf.mxu0
    %v222 = vpop.f32.mrf.mxu0
    %223 = vdwg.mxu0
    %v224 = vadd.f32 %v55, %v219
    %225 = vst [vmem:[#allocation7] sm:$0xf] %v224
    // Predicated region
    $region22: #{tpu_custom_call.1} parent=1 // pred_check
      _
    $region23: #{tpu_custom_call.1} parent=1 // pred_check_branch
      %227 = sbr.rel (0) target = $region25
    $region24: #{tpu_custom_call.1} parent=1 // pred_region
      %s229 = ssub.s32 64, 64
      %230 = vsyncadd [#allocation4], %s229
      %s232 = sshll.u32 [#allocation7], 4
      %s233 = int_to_ptr.vmem [resolvable:$true] %s232
      %235 = dma.vmem_to_hbm [thread:$0]  %s233, 64, %s2, [#allocation4]
    $region25: #{tpu_custom_call.1} parent=1 // pred_fallthru
      _
    // Predicated region
    $region26: #{tpu_custom_call.1} parent=1 // pred_check
      _
    $region27: #{tpu_custom_call.1} parent=1 // pred_check_branch
      %237 = sbr.rel (0) target = $region29
    $region28: #{tpu_custom_call.1} parent=1 // pred_region
      %238 = dma.done [#allocation4], 64
    $region29: #{tpu_custom_call.1} parent=1 // pred_fallthru
      _
    %239 = vsyncpa [#allocation3], 1
    %240 = vsyncpa [#allocation6], 1
    %241 = vsyncpa [#allocation4], 1

</llo_original>
